<compile_context>
chip_gen: v7x
topology: tpu7x:2x2x1
jax: 0.10.0
libtpu: 0.0.40
codegen_flags: <defaults>
</compile_context>

<pallas_src>
import functools

import jax
import jax.numpy as jnp
import numpy as np
from jax import lax
from jax.experimental import pallas as pl
from jax.experimental.pallas import tpu as pltpu


def _round_up(x, m):
    return (x + m - 1) // m * m


def vq_kernel(x_ref, w_pre_t_ref, b_pre_ref, cb_m2_ref, cb_sq_ref, w_fused_t_ref,
              b_post_ref, y_ref, idx_ref, sqerr_ref, counts_ref, *, hw_total, ragged):
    """One (sample n, tile i) block of TM spatial positions (columns).

    x_ref         : (1, Cin, TM)   input columns, channels-major
    w_pre_t_ref   : (D, Cin)       pre-VQ 1x1 conv weight (matmul layout)
    b_pre_ref     : (D, 1)
    cb_m2_ref     : (K, D)         -2 * codebook (sign/scale folded in the wrapper)
    cb_sq_ref     : (K, 1)         per-code squared norms (from the ORIGINAL codebook)
    w_fused_t_ref : (Cout, K)      (codebook @ w_post)^T -- post-VQ conv fused in
    b_post_ref    : (Cout, 1)
    y_ref         : (1, Cout, TM)  post-VQ output columns
    idx_ref       : (1, 1, TM)     nearest-codebook indices (int32)
    sqerr_ref     : (1, 1, 1, 1)   per-tile sum of min squared distances (valid cols)
    counts_ref    : (1, 1, K, 1)   per-tile one-hot counts per codebook entry
    """
    i = pl.program_id(1)
    tm = x_ref.shape[-1]
    K, D = cb_m2_ref.shape

    x = x_ref[0]                                                              # (C, TM)

    # --- pre-VQ 1x1 conv ---------------------------------------------------
    e_t = jnp.dot(w_pre_t_ref[...], x,
                  preferred_element_type=jnp.float32) + b_pre_ref[...]        # (D, TM)

    # --- partial distances (||e||^2 omitted: constant per column, argmin-safe)
    # d_p[k, m] = ||c_k||^2 - 2 c_k . e_m
    d_p = jnp.dot(cb_m2_ref[...], e_t,
                  preferred_element_type=jnp.float32) + cb_sq_ref[...]        # (K, TM)

    # --- first-argmin along the codebook (sublane) axis ---------------------
    min_dp = jnp.min(d_p, axis=0, keepdims=True)                              # (1, TM)
    k_iota = lax.broadcasted_iota(jnp.int32, d_p.shape, 0)                    # (K, TM)
    idx = jnp.min(jnp.where(d_p <= min_dp, k_iota, K), axis=0, keepdims=True) # (1, TM)
    onehot_t = (k_iota == idx).astype(jnp.float32)                            # (K, TM)

    # per-column squared error = selected distance; add ||e||^2 only on the (1, TM) row
    e_sq = jnp.dot(jnp.ones((1, D), jnp.float32), e_t * e_t,
                   preferred_element_type=jnp.float32)                        # (1, TM)
    min_d = jnp.maximum(min_dp + e_sq, 0.0)                                   # (1, TM)

    # --- fused post-VQ 1x1 conv: y = (codebook @ w_post)^T @ onehot + b -----
    y_ref[0] = jnp.dot(w_fused_t_ref[...], onehot_t,
                       preferred_element_type=jnp.float32) + b_post_ref[...]
    idx_ref[0] = idx

    # --- per-tile loss / perplexity partials (lane reductions on the XLU) ---
    if ragged:
        is_last = i == pl.num_programs(1) - 1

        @pl.when(jnp.logical_not(is_last))
        def _():
            sqerr_ref[0, 0] = jnp.sum(min_d, axis=1, keepdims=True)
            counts_ref[0, 0] = jnp.sum(onehot_t, axis=1, keepdims=True)

        @pl.when(is_last)
        def _():
            # Mask the out-of-bounds tail columns of the partial block (their contents
            # are undefined); jnp.where (not multiply) so stale NaN/Inf cannot leak.
            valid = (lax.broadcasted_iota(jnp.int32, (1, tm), 1) + i * tm) < hw_total
            sqerr_ref[0, 0] = jnp.sum(jnp.where(valid, min_d, 0.0),
                                      axis=1, keepdims=True)
            counts_ref[0, 0] = jnp.sum(jnp.where(valid, onehot_t, 0.0),
                                       axis=1, keepdims=True)
    else:
        sqerr_ref[0, 0] = jnp.sum(min_d, axis=1, keepdims=True)
        counts_ref[0, 0] = jnp.sum(onehot_t, axis=1, keepdims=True)


def vq_forward(x_nchw, w_pre, b_pre, codebook, w_post, b_post,
               commitment_cost, *, tm=2048):
    """Forward pass of the VQ module (embedding_prior_input=False branch).

    Parameter layouts match the matmul-friendly convention:
      w_pre (Cin, D), b_pre (1, D), codebook (K, D), w_post (D, Cin), b_post (1, Cin).
    Returns (loss, global_decode [NCHW], perplexity, indices [(M, 1) int32]).
    """
    N, C, H, W = x_nchw.shape
    K, D = codebook.shape
    hw = H * W
    M = N * hw

    # Free reshape: NCHW is channels-major per sample, spatial on the lane axis.
    x3 = x_nchw.reshape(N, C, hw)                                              # (N, C, HW)

    # --- tile-size selection -------------------------------------------------
    tm_target = max(128, _round_up(tm, 128))
    tm_eff = hw if hw <= tm_target else tm_target
    num_tiles = pl.cdiv(hw, tm_eff)
    # v7x megacore: avoid collapsing the grid to a single step for mid-sized inputs.
    if N * num_tiles < 2 and hw >= 256:
        tm_eff = _round_up(pl.cdiv(hw, 2), 128)
        num_tiles = pl.cdiv(hw, tm_eff)
    ragged = (num_tiles * tm_eff != hw)

    # --- grid-invariant precomputation (hoisted out of the kernel) -----------
    w_pre_t = w_pre.T                                                          # (D, Cin)
    b_pre_col = b_pre.reshape(-1, 1)                                           # (D, 1)
    cb_m2 = -2.0 * codebook                                                    # exact scale
    cb_sq_col = jnp.sum(codebook * codebook, axis=1, keepdims=True)            # (K, 1)
    w_fused_t = jnp.dot(codebook, w_post).T                                    # (Cout, K)
    b_post_col = b_post.reshape(-1, 1)                                         # (Cout, 1)

    grid_spec = pltpu.PrefetchScalarGridSpec(
        num_scalar_prefetch=0,
        grid=(N, num_tiles),
        in_specs=[
            pl.BlockSpec((1, C, tm_eff), lambda n, i: (n, 0, i)),
            pl.BlockSpec((D, C), lambda n, i: (0, 0)),
            pl.BlockSpec((D, 1), lambda n, i: (0, 0)),
            pl.BlockSpec((K, D), lambda n, i: (0, 0)),
            pl.BlockSpec((K, 1), lambda n, i: (0, 0)),
            pl.BlockSpec((C, K), lambda n, i: (0, 0)),
            pl.BlockSpec((C, 1), lambda n, i: (0, 0)),
        ],
        out_specs=[
            pl.BlockSpec((1, C, tm_eff), lambda n, i: (n, 0, i)),
            pl.BlockSpec((1, 1, tm_eff), lambda n, i: (n, 0, i)),
            pl.BlockSpec((1, 1, 1, 1), lambda n, i: (n, i, 0, 0)),
            pl.BlockSpec((1, 1, K, 1), lambda n, i: (n, i, 0, 0)),
        ],
    )

    compiler_kwargs = dict(dimension_semantics=("parallel", "parallel"))
    if tm_eff > 2048:
        # Only needed if the caller asks for very large tiles (v5e default scoped VMEM).
        compiler_kwargs["vmem_limit_bytes"] = 64 * 1024 * 1024

    y3, idx3, sqerr, counts = pl.pallas_call(
        functools.partial(vq_kernel, hw_total=hw, ragged=ragged),
        out_shape=(
            jax.ShapeDtypeStruct((N, C, hw), jnp.float32),
            jax.ShapeDtypeStruct((N, 1, hw), jnp.int32),
            jax.ShapeDtypeStruct((N, num_tiles, 1, 1), jnp.float32),
            jax.ShapeDtypeStruct((N, num_tiles, K, 1), jnp.float32),
        ),
        grid_spec=grid_spec,
        compiler_params=pltpu.CompilerParams(**compiler_kwargs),
    )(x3, w_pre_t, b_pre_col, cb_m2, cb_sq_col, w_fused_t, b_post_col)

    mse = jnp.sum(sqerr) / (M * D)
    # q_latent_loss + commitment_cost * e_latent_loss (identical values at forward time)
    loss = (1.0 + commitment_cost) * mse

    avg_probs = jnp.sum(counts, axis=(0, 1, 3)) / M                            # (K,)
    perplexity = jnp.exp(-jnp.sum(avg_probs * jnp.log(avg_probs + 1e-10)))

    global_decode = y3.reshape(N, C, H, W)                                     # free reshape
    indices = idx3.reshape(M)[:, None]                                         # (M, 1)
    return loss, global_decode, perplexity, indices


def vq_forward_ref(x_nchw, w_pre, b_pre, codebook, w_post, b_post, commitment_cost):
    """Pure-JAX reference of the same forward pass."""
    N, C, H, W = x_nchw.shape
    x = jnp.transpose(x_nchw, (0, 2, 3, 1)).reshape(-1, C)
    e = x @ w_pre + b_pre
    d = (jnp.sum(e * e, axis=1, keepdims=True)
         + jnp.sum(codebook * codebook, axis=1)[None, :]
         - 2.0 * e @ codebook.T)
    idx = jnp.argmin(d, axis=1)
    quant = codebook[idx]
    mse = jnp.mean((quant - e) ** 2)
    loss = (1.0 + commitment_cost) * mse
    onehot = jax.nn.one_hot(idx, codebook.shape[0], dtype=jnp.float32)
    avg_probs = jnp.mean(onehot, axis=0)
    perplexity = jnp.exp(-jnp.sum(avg_probs * jnp.log(avg_probs + 1e-10)))
    y = quant @ w_post + b_post
    return loss, jnp.transpose(y.reshape(N, H, W, C), (0, 3, 1, 2)), perplexity, idx[:, None]


if __name__ == "__main__":
    # Module config (small): num_hiddens=32, embedding_dim=16, num_embeddings=64
    num_hiddens = 32
    embedding_dim = 16
    num_embeddings = 64
    commitment_cost = 0.25

    def make_inputs(key, N, H, W):
        kx, k1, k2, k3, k4, k5 = jax.random.split(key, 6)
        # A torch Conv2d(Cin, Cout, 1) weight (Cout, Cin, 1, 1) corresponds to w.T here.
        x = jax.random.normal(kx, (N, num_hiddens, H, W), dtype=jnp.float32)   # NCHW input
        w_pre = jax.random.normal(k1, (num_hiddens, embedding_dim), dtype=jnp.float32) * 0.1
        b_pre = jax.random.normal(k2, (1, embedding_dim), dtype=jnp.float32) * 0.1
        codebook = jax.random.uniform(k3, (num_embeddings, embedding_dim),
                                      dtype=jnp.float32,
                                      minval=-1.0 / num_embeddings,
                                      maxval=1.0 / num_embeddings)
        w_post = jax.random.normal(k4, (embedding_dim, num_hiddens), dtype=jnp.float32) * 0.1
        b_post = jax.random.normal(k5, (1, num_hiddens), dtype=jnp.float32) * 0.1
        return x, w_pre, b_pre, codebook, w_post, b_post

    key = jax.random.PRNGKey(0)
    _, key_b = jax.random.split(key)

    # Config 1: even tiles (2 samples, 8x8).  Config 2: N=1, 15x20 -> exercises the
    # split-for-megacore heuristic and the ragged / partial-block path.
    for cfg_key, N, H, W in [(key, 2, 8, 8), (key_b, 1, 15, 20)]:
        args = make_inputs(cfg_key, N, H, W)
        loss, global_decode, perplexity, indices = jax.block_until_ready(
            vq_forward(*args, commitment_cost))

        loss_r, dec_r, perp_r, idx_r = vq_forward_ref(*args, commitment_cost)
        np.testing.assert_allclose(np.asarray(loss), np.asarray(loss_r), rtol=1e-3, atol=1e-3)
        np.testing.assert_allclose(np.asarray(global_decode), np.asarray(dec_r),
                                   rtol=1e-3, atol=1e-3)
        np.testing.assert_allclose(np.asarray(perplexity), np.asarray(perp_r),
                                   rtol=1e-3, atol=1e-3)
        np.testing.assert_array_equal(np.asarray(indices), np.asarray(idx_r))

        assert global_decode.shape == (N, num_hiddens, H, W)
        assert indices.shape == (N * H * W, 1)

    print("KERNEL_OK")
</pallas_src>

<mosaic_0001>
module attributes {stable_mosaic.version = 11 : i64} {
  func.func @vq_kernel(%arg0: i32, %arg1: i32, %arg2: memref<1x32x64xf32, #tpu.memory_space<vmem>>, %arg3: memref<16x32xf32, #tpu.memory_space<vmem>>, %arg4: memref<16x1xf32, #tpu.memory_space<vmem>>, %arg5: memref<64x16xf32, #tpu.memory_space<vmem>>, %arg6: memref<64x1xf32, #tpu.memory_space<vmem>>, %arg7: memref<32x64xf32, #tpu.memory_space<vmem>>, %arg8: memref<32x1xf32, #tpu.memory_space<vmem>>, %arg9: memref<1x32x64xf32, #tpu.memory_space<vmem>>, %arg10: memref<1x1x64xi32, #tpu.memory_space<vmem>>, %arg11: memref<1x1x1x1xf32, #tpu.memory_space<vmem>>, %arg12: memref<1x1x64x1xf32, #tpu.memory_space<vmem>>) attributes {dimension_semantics = [#tpu.dimension_semantics<parallel>, #tpu.dimension_semantics<parallel>], iteration_bounds = array<i64: 2, 1>, scalar_prefetch = 0 : i64, scratch_operands = 0 : i64, tpu.core_type = #tpu.core_type<tc>, window_params = [{transform_indices = @transform_0, window_bounds = array<i64: 1, 32, 64>}, {pipeline_mode = #tpu.pipeline_mode<synchronous>, transform_indices = @transform_1, window_bounds = array<i64: 16, 32>}, {pipeline_mode = #tpu.pipeline_mode<synchronous>, transform_indices = @transform_2, window_bounds = array<i64: 16, 1>}, {pipeline_mode = #tpu.pipeline_mode<synchronous>, transform_indices = @transform_3, window_bounds = array<i64: 64, 16>}, {pipeline_mode = #tpu.pipeline_mode<synchronous>, transform_indices = @transform_4, window_bounds = array<i64: 64, 1>}, {pipeline_mode = #tpu.pipeline_mode<synchronous>, transform_indices = @transform_5, window_bounds = array<i64: 32, 64>}, {pipeline_mode = #tpu.pipeline_mode<synchronous>, transform_indices = @transform_6, window_bounds = array<i64: 32, 1>}, {transform_indices = @transform_7, window_bounds = array<i64: 1, 32, 64>}, {transform_indices = @transform_8, window_bounds = array<i64: 1, 1, 64>}, {transform_indices = @transform_9, window_bounds = array<i64: 1, 1, 1, 1>}, {transform_indices = @transform_10, window_bounds = array<i64: 1, 1, 64, 1>}]} {
    %c0 = arith.constant 0 : index
    %c0_0 = arith.constant 0 : index
    %c0_1 = arith.constant 0 : index
    %0 = vector.load %arg2[%c0, %c0_0, %c0_1] : memref<1x32x64xf32, #tpu.memory_space<vmem>>, vector<1x32x64xf32>
    %1 = vector.shape_cast %0 : vector<1x32x64xf32> to vector<32x64xf32>
    %c0_2 = arith.constant 0 : index
    %c0_3 = arith.constant 0 : index
    %2 = vector.load %arg3[%c0_2, %c0_3] : memref<16x32xf32, #tpu.memory_space<vmem>>, vector<16x32xf32>
    %cst = arith.constant dense<0.000000e+00> : vector<16x64xf32>
    %3 = tpu.matmul %2, %1, %cst {dimension_numbers = #tpu.dot_dimension_numbers<[1], [0], [0], [1], [0, 0, 1, 1], [], []>} : vector<16x32xf32>, vector<32x64xf32>, vector<16x64xf32> -> vector<16x64xf32>
    %c0_4 = arith.constant 0 : index
    %c0_5 = arith.constant 0 : index
    %4 = vector.load %arg4[%c0_4, %c0_5] : memref<16x1xf32, #tpu.memory_space<vmem>>, vector<16x1xf32>
    %5 = vector.broadcast %4 : vector<16x1xf32> to vector<16x64xf32>
    %6 = arith.addf %3, %5 : vector<16x64xf32>
    %c0_6 = arith.constant 0 : index
    %c0_7 = arith.constant 0 : index
    %7 = vector.load %arg5[%c0_6, %c0_7] : memref<64x16xf32, #tpu.memory_space<vmem>>, vector<64x16xf32>
    %cst_8 = arith.constant dense<0.000000e+00> : vector<64x64xf32>
    %8 = tpu.matmul %7, %6, %cst_8 {dimension_numbers = #tpu.dot_dimension_numbers<[1], [0], [0], [1], [0, 0, 1, 1], [], []>} : vector<64x16xf32>, vector<16x64xf32>, vector<64x64xf32> -> vector<64x64xf32>
    %c0_9 = arith.constant 0 : index
    %c0_10 = arith.constant 0 : index
    %9 = vector.load %arg6[%c0_9, %c0_10] : memref<64x1xf32, #tpu.memory_space<vmem>>, vector<64x1xf32>
    %10 = vector.broadcast %9 : vector<64x1xf32> to vector<64x64xf32>
    %11 = arith.addf %8, %10 : vector<64x64xf32>
    %cst_11 = arith.constant dense<0x7F800000> : vector<64xf32>
    %12 = vector.multi_reduction <minimumf>, %11, %cst_11 [0] : vector<64x64xf32> to vector<64xf32>
    %13 = vector.shape_cast %12 : vector<64xf32> to vector<1x64xf32>
    %14 = tpu.iota {dimensions = array<i32: 0>} : vector<64x64xi32>
    %15 = vector.broadcast %13 : vector<1x64xf32> to vector<64x64xf32>
    %16 = arith.cmpf ole, %11, %15 : vector<64x64xf32>
    %c64_i32 = arith.constant 64 : i32
    %17 = vector.broadcast %c64_i32 : i32 to vector<64x64xi32>
    %18 = arith.select %16, %14, %17 : vector<64x64xi1>, vector<64x64xi32>
    %cst_12 = arith.constant dense<2147483647> : vector<64xi32>
    %19 = vector.multi_reduction <minsi>, %18, %cst_12 [0] : vector<64x64xi32> to vector<64xi32>
    %20 = vector.shape_cast %19 : vector<64xi32> to vector<1x64xi32>
    %21 = vector.broadcast %20 : vector<1x64xi32> to vector<64x64xi32>
    %22 = arith.cmpi eq, %14, %21 : vector<64x64xi32>
    %23 = arith.extui %22 : vector<64x64xi1> to vector<64x64xi32>
    %24 = arith.sitofp %23 : vector<64x64xi32> to vector<64x64xf32>
    %cst_13 = arith.constant 1.000000e+00 : f32
    %25 = vector.broadcast %cst_13 : f32 to vector<1x16xf32>
    %26 = arith.mulf %6, %6 : vector<16x64xf32>
    %cst_14 = arith.constant dense<0.000000e+00> : vector<1x64xf32>
    %27 = tpu.matmul %25, %26, %cst_14 {dimension_numbers = #tpu.dot_dimension_numbers<[1], [0], [0], [1], [0, 0, 1, 1], [], []>} : vector<1x16xf32>, vector<16x64xf32>, vector<1x64xf32> -> vector<1x64xf32>
    %28 = arith.addf %13, %27 : vector<1x64xf32>
    %cst_15 = arith.constant 0.000000e+00 : f32
    %29 = vector.broadcast %cst_15 : f32 to vector<1x64xf32>
    %30 = arith.maximumf %28, %29 : vector<1x64xf32>
    %c0_16 = arith.constant 0 : index
    %c0_17 = arith.constant 0 : index
    %31 = vector.load %arg7[%c0_16, %c0_17] : memref<32x64xf32, #tpu.memory_space<vmem>>, vector<32x64xf32>
    %cst_18 = arith.constant dense<0.000000e+00> : vector<32x64xf32>
    %32 = tpu.matmul %31, %24, %cst_18 {dimension_numbers = #tpu.dot_dimension_numbers<[1], [0], [0], [1], [0, 0, 1, 1], [], []>} : vector<32x64xf32>, vector<64x64xf32>, vector<32x64xf32> -> vector<32x64xf32>
    %c0_19 = arith.constant 0 : index
    %c0_20 = arith.constant 0 : index
    %33 = vector.load %arg8[%c0_19, %c0_20] : memref<32x1xf32, #tpu.memory_space<vmem>>, vector<32x1xf32>
    %34 = vector.broadcast %33 : vector<32x1xf32> to vector<32x64xf32>
    %35 = arith.addf %32, %34 : vector<32x64xf32>
    %c0_21 = arith.constant 0 : index
    %c0_22 = arith.constant 0 : index
    %c0_23 = arith.constant 0 : index
    %36 = vector.load %arg9[%c0_21, %c0_22, %c0_23] : memref<1x32x64xf32, #tpu.memory_space<vmem>>, vector<1x32x64xf32>
    %37 = vector.shape_cast %36 : vector<1x32x64xf32> to vector<32x64xf32>
    %38 = vector.shape_cast %35 : vector<32x64xf32> to vector<1x32x64xf32>
    tpu.vector_store %arg9[%c0_21, %c0_22, %c0_23], %38 {strides = array<i32>} : memref<1x32x64xf32, #tpu.memory_space<vmem>>, vector<1x32x64xf32>,
    %c0_24 = arith.constant 0 : index
    %c0_25 = arith.constant 0 : index
    %c0_26 = arith.constant 0 : index
    %39 = vector.load %arg10[%c0_24, %c0_25, %c0_26] : memref<1x1x64xi32, #tpu.memory_space<vmem>>, vector<1x1x64xi32>
    %40 = vector.shape_cast %39 : vector<1x1x64xi32> to vector<1x64xi32>
    %41 = vector.shape_cast %20 : vector<1x64xi32> to vector<1x1x64xi32>
    tpu.vector_store %arg10[%c0_24, %c0_25, %c0_26], %41 {strides = array<i32>} : memref<1x1x64xi32, #tpu.memory_space<vmem>>, vector<1x1x64xi32>,
    %cst_27 = arith.constant dense<0.000000e+00> : vector<1xf32>
    %42 = vector.multi_reduction <add>, %30, %cst_27 [1] : vector<1x64xf32> to vector<1xf32>
    %43 = vector.shape_cast %42 : vector<1xf32> to vector<1x1xf32>
    %c0_28 = arith.constant 0 : index
    %c0_29 = arith.constant 0 : index
    %c0_30 = arith.constant 0 : index
    %c0_31 = arith.constant 0 : index
    %44 = vector.load %arg11[%c0_28, %c0_29, %c0_30, %c0_31] : memref<1x1x1x1xf32, #tpu.memory_space<vmem>>, vector<1x1x1x1xf32>
    %45 = vector.shape_cast %44 : vector<1x1x1x1xf32> to vector<1x1xf32>
    %46 = vector.shape_cast %43 : vector<1x1xf32> to vector<1x1x1x1xf32>
    tpu.vector_store %arg11[%c0_28, %c0_29, %c0_30, %c0_31], %46 {strides = array<i32>} : memref<1x1x1x1xf32, #tpu.memory_space<vmem>>, vector<1x1x1x1xf32>,
    %cst_32 = arith.constant dense<0.000000e+00> : vector<64xf32>
    %47 = vector.multi_reduction <add>, %24, %cst_32 [1] : vector<64x64xf32> to vector<64xf32>
    %48 = vector.shape_cast %47 : vector<64xf32> to vector<64x1xf32>
    %c0_33 = arith.constant 0 : index
    %c0_34 = arith.constant 0 : index
    %c0_35 = arith.constant 0 : index
    %c0_36 = arith.constant 0 : index
    %49 = vector.load %arg12[%c0_33, %c0_34, %c0_35, %c0_36] : memref<1x1x64x1xf32, #tpu.memory_space<vmem>>, vector<1x1x64x1xf32>
    %50 = vector.shape_cast %49 : vector<1x1x64x1xf32> to vector<64x1xf32>
    %51 = vector.shape_cast %48 : vector<64x1xf32> to vector<1x1x64x1xf32>
    tpu.vector_store %arg12[%c0_33, %c0_34, %c0_35, %c0_36], %51 {strides = array<i32>} : memref<1x1x64x1xf32, #tpu.memory_space<vmem>>, vector<1x1x64x1xf32>,
    return
  }
  func.func @transform_0(%arg0: i32, %arg1: i32) -> (i32, i32, i32) {
    %c0_i32 = arith.constant 0 : i32
    %c0_i32_0 = arith.constant 0 : i32
    return %arg0, %c0_i32, %arg1 : i32, i32, i32
  }
  func.func @transform_1(%arg0: i32, %arg1: i32) -> (i32, i32) {
    %c0_i32 = arith.constant 0 : i32
    %c0_i32_0 = arith.constant 0 : i32
    %c0_i32_1 = arith.constant 0 : i32
    return %c0_i32, %c0_i32_0 : i32, i32
  }
  func.func @transform_2(%arg0: i32, %arg1: i32) -> (i32, i32) {
    %c0_i32 = arith.constant 0 : i32
    %c0_i32_0 = arith.constant 0 : i32
    %c0_i32_1 = arith.constant 0 : i32
    return %c0_i32, %c0_i32_0 : i32, i32
  }
  func.func @transform_3(%arg0: i32, %arg1: i32) -> (i32, i32) {
    %c0_i32 = arith.constant 0 : i32
    %c0_i32_0 = arith.constant 0 : i32
    %c0_i32_1 = arith.constant 0 : i32
    return %c0_i32, %c0_i32_0 : i32, i32
  }
  func.func @transform_4(%arg0: i32, %arg1: i32) -> (i32, i32) {
    %c0_i32 = arith.constant 0 : i32
    %c0_i32_0 = arith.constant 0 : i32
    %c0_i32_1 = arith.constant 0 : i32
    return %c0_i32, %c0_i32_0 : i32, i32
  }
  func.func @transform_5(%arg0: i32, %arg1: i32) -> (i32, i32) {
    %c0_i32 = arith.constant 0 : i32
    %c0_i32_0 = arith.constant 0 : i32
    %c0_i32_1 = arith.constant 0 : i32
    return %c0_i32, %c0_i32_0 : i32, i32
  }
  func.func @transform_6(%arg0: i32, %arg1: i32) -> (i32, i32) {
    %c0_i32 = arith.constant 0 : i32
    %c0_i32_0 = arith.constant 0 : i32
    %c0_i32_1 = arith.constant 0 : i32
    return %c0_i32, %c0_i32_0 : i32, i32
  }
  func.func @transform_7(%arg0: i32, %arg1: i32) -> (i32, i32, i32) {
    %c0_i32 = arith.constant 0 : i32
    %c0_i32_0 = arith.constant 0 : i32
    return %arg0, %c0_i32, %arg1 : i32, i32, i32
  }
  func.func @transform_8(%arg0: i32, %arg1: i32) -> (i32, i32, i32) {
    %c0_i32 = arith.constant 0 : i32
    %c0_i32_0 = arith.constant 0 : i32
    return %arg0, %c0_i32, %arg1 : i32, i32, i32
  }
  func.func @transform_9(%arg0: i32, %arg1: i32) -> (i32, i32, i32, i32) {
    %c0_i32 = arith.constant 0 : i32
    %c0_i32_0 = arith.constant 0 : i32
    %c0_i32_1 = arith.constant 0 : i32
    return %arg0, %arg1, %c0_i32, %c0_i32_0 : i32, i32, i32, i32
  }
  func.func @transform_10(%arg0: i32, %arg1: i32) -> (i32, i32, i32, i32) {
    %c0_i32 = arith.constant 0 : i32
    %c0_i32_0 = arith.constant 0 : i32
    %c0_i32_1 = arith.constant 0 : i32
    return %arg0, %arg1, %c0_i32, %c0_i32_0 : i32, i32, i32, i32
  }
}

</mosaic_0001>

<llo_original>
// kernel: tpu_custom_call.1
$region0: #{tpu_custom_call.1}
  #allocation0 [shape = 'u32[]', space=smem, size = 0x4, offset = 0x4, fixed_abs, tag = 'smem constant byte address 0x4 - core index']
  #allocation1 [shape = 'u32[144,128]{1,0:T(1,128)}', space=vmem, size = 0x12000, scoped, tag = 'internal scratch']
  %s0 = inlined_call_operand.vmem [shape: f32[2,32,64], index: 0, kind: input, shape index: {}]
  %s1 = inlined_call_operand.vmem [shape: f32[16,32], index: 1, kind: input, shape index: {}]
  %s2 = inlined_call_operand.vmem [shape: f32[16,1], index: 2, kind: input, shape index: {}]
  %s3 = inlined_call_operand.vmem [shape: f32[64,16], index: 3, kind: input, shape index: {}]
  %s4 = inlined_call_operand.vmem [shape: f32[64,1], index: 4, kind: input, shape index: {}]
  %s5 = inlined_call_operand.vmem [shape: f32[32,64], index: 5, kind: input, shape index: {}]
  %s6 = inlined_call_operand.vmem [shape: f32[32,1], index: 6, kind: input, shape index: {}]
  %s7 = inlined_call_operand.hbm [shape: f32[2,32,64], index: 7, kind: output, shape index: {0}]
  %s8 = inlined_call_operand.hbm [shape: s32[2,1,64], index: 8, kind: output, shape index: {1}]
  %s9 = inlined_call_operand.vmem [shape: f32[2,1,1,1], index: 9, kind: output, shape index: {2}]
  %s10 = inlined_call_operand.vmem [shape: f32[2,1,64,1], index: 10, kind: output, shape index: {3}]
  %11 = xla_tuple %s7, %s8, %s9, %s10
  %s12 = sld [smem:[#allocation0]]
  $region85: #{tpu_custom_call.1} parent=0
    _
  %s14 = ssub.s32 1, %s12
  %s15 = scalar_select 0, %s14, %s12
  $region1: #{tpu_custom_call.1} parent=0
    #allocation2 [shape = 'u8[32768]{0}', space=vmem, size = 0x8000, scoped, tag = 'output window, operand 0']
    #allocation3 [shape = 's32[2]{0}', space=sflag, size = 0x8, scoped, tag = 'scoped memory for tpu_custom_call.1']
    #allocation4 [shape = 'u8[1024]{0}', space=vmem, size = 0x400, scoped, tag = 'output window, operand 1']
    #allocation5 [shape = 's32[2]{0}', space=sflag, size = 0x8, scoped, tag = 'scoped memory for tpu_custom_call.1']
    %16 = vsyncpa [#allocation3], 0
    %s17 = scalar_lea.sflag [#allocation3], 1
    %18 = vsyncpa %s17, 0
    %19 = vsyncpa [#allocation5], 0
    %s20 = scalar_lea.sflag [#allocation5], 1
    %21 = vsyncpa %s20, 0
    loop: start=0, step=1, limit=4
    $region2: #{tpu_custom_call.1} parent=1 // loop_pre_header
      _
    $region3: #{tpu_custom_call.1} parent=1 // loop_header
      %s23 = sphi 0, %s27
      %p24 = scmp.ge.s32.totalorder %s23, 4
      %s30 = sphi 0, %s42
      %s31 = sphi 0, %s38
      %s32 = sphi 0, %s30
      %s33 = sphi 0, %s31
      %s34 = sphi 0, %s32
      %s35 = sphi 0, %s33
      %s47 = sphi 0, %s49
      %s50 = sphi 0, %s47
      %s51 = sphi 0, %s50
      %s67 = sphi 0, %s51
      %s71 = sphi 0, %s71
      %s73 = sphi 0, %s71
      %s74 = sphi 0, %s73
      %s88 = sphi 0, %s74
      %s92 = sphi 0, %s92
      %s94 = sphi 0, %s92
      %s95 = sphi 0, %s94
      %s109 = sphi 0, %s95
      %s113 = sphi 0, %s113
      %s115 = sphi 0, %s113
      %s116 = sphi 0, %s115
      %s130 = sphi 0, %s116
      %s134 = sphi 0, %s134
      %s136 = sphi 0, %s134
      %s137 = sphi 0, %s136
      %s151 = sphi 0, %s137
      %s155 = sphi 0, %s155
      %s157 = sphi 0, %s155
      %s158 = sphi 0, %s157
      %s172 = sphi 0, %s158
      %s176 = sphi 0, %s176
      %s178 = sphi 0, %s176
      %s179 = sphi 0, %s178
      %s193 = sphi 0, %s179
      %s201 = sphi 0, %s203
      %s204 = sphi 0, %s201
      %s205 = sphi 0, %s204
      %s221 = sphi 0, %s205
      %s229 = sphi 0, %s231
      %s232 = sphi 0, %s229
      %s233 = sphi 0, %s232
      %s249 = sphi 0, %s233
      %s257 = sphi 0, %s259
      %s260 = sphi 0, %s257
      %s261 = sphi 0, %s260
      %s277 = sphi 0, %s261
      %s285 = sphi 0, %s287
      %s288 = sphi 0, %s285
      %s289 = sphi 0, %s288
      %s305 = sphi 0, %s289
    $region4: #{tpu_custom_call.1} parent=1 // loop_header_branch
      %26 = sbr.rel (%p24) target = $region8
    $region5: #{tpu_custom_call.1} parent=1 // loop_body
      %s28 = ssub.s32 %s23, 1
      %s29 = ssub.s32 %s23, 2
      %s36 = sadd.s32 1, %s31
      %p37 = scmp.ge.s32.totalorder %s36, 1
      %s38 = scalar_select %p37, 0, %s36
      %s39 = sadd.s32 1, %s30
      %s40 = scalar_select %p37, %s39, %s30
      %p41 = scmp.ge.s32.totalorder %s40, 2
      %s42 = scalar_select %p41, 0, %s40
      %s43 = ssub.s32 %s30, %s42
      %s44 = ssub.s32 %s31, %s38
      %s45 = sor.u32 %s43, %s44
      %p46 = scmp.eq.s32.totalorder %s45, 0
      %s48 = sadd.s32 %s47, 1
      %s49 = scalar_select %p46, %s47, %s48
      %p52 = pneg %p46
      %p53 = scmp.eq.s32.totalorder %s23, 1
      %p54 = por %p52, %p53
      %p55 = scmp.ne.s32.totalorder %s47, %s50
      %p56 = scmp.eq.s32.totalorder %s23, 0
      %p57 = por %p55, %p56
      %p58 = scmp.ne.s32.totalorder %s47, %s50
      %p59 = scmp.eq.s32.totalorder %s28, 1
      %p60 = por %p58, %p59
      %p61 = scmp.ne.s32.totalorder %s50, %s51
      %p62 = scmp.eq.s32.totalorder %s28, 0
      %p63 = por %p61, %p62
      %p64 = scmp.ne.s32.totalorder %s50, %s51
      %p65 = scmp.eq.s32.totalorder %s29, 1
      %p66 = por %p64, %p65
      %p68 = scmp.ne.s32.totalorder %s51, %s67
      %p69 = scmp.eq.s32.totalorder %s29, 0
      %p70 = por %p68, %p69
      %s72 = sadd.s32 %s71, 1
      %p75 = scmp.eq.s32.totalorder %s23, 1
      %p76 = scmp.ne.s32.totalorder %s71, %s73
      %p77 = scmp.eq.s32.totalorder %s23, 0
      %p78 = por %p76, %p77
      %p79 = scmp.ne.s32.totalorder %s71, %s73
      %p80 = scmp.eq.s32.totalorder %s28, 1
      %p81 = por %p79, %p80
      %p82 = scmp.ne.s32.totalorder %s73, %s74
      %p83 = scmp.eq.s32.totalorder %s28, 0
      %p84 = por %p82, %p83
      %p85 = scmp.ne.s32.totalorder %s73, %s74
      %p86 = scmp.eq.s32.totalorder %s29, 1
      %p87 = por %p85, %p86
      %p89 = scmp.ne.s32.totalorder %s74, %s88
      %p90 = scmp.eq.s32.totalorder %s29, 0
      %p91 = por %p89, %p90
      %s93 = sadd.s32 %s92, 1
      %p96 = scmp.eq.s32.totalorder %s23, 1
      %p97 = scmp.ne.s32.totalorder %s92, %s94
      %p98 = scmp.eq.s32.totalorder %s23, 0
      %p99 = por %p97, %p98
      %p100 = scmp.ne.s32.totalorder %s92, %s94
      %p101 = scmp.eq.s32.totalorder %s28, 1
      %p102 = por %p100, %p101
      %p103 = scmp.ne.s32.totalorder %s94, %s95
      %p104 = scmp.eq.s32.totalorder %s28, 0
      %p105 = por %p103, %p104
      %p106 = scmp.ne.s32.totalorder %s94, %s95
      %p107 = scmp.eq.s32.totalorder %s29, 1
      %p108 = por %p106, %p107
      %p110 = scmp.ne.s32.totalorder %s95, %s109
      %p111 = scmp.eq.s32.totalorder %s29, 0
      %p112 = por %p110, %p111
      %s114 = sadd.s32 %s113, 1
      %p117 = scmp.eq.s32.totalorder %s23, 1
      %p118 = scmp.ne.s32.totalorder %s113, %s115
      %p119 = scmp.eq.s32.totalorder %s23, 0
      %p120 = por %p118, %p119
      %p121 = scmp.ne.s32.totalorder %s113, %s115
      %p122 = scmp.eq.s32.totalorder %s28, 1
      %p123 = por %p121, %p122
      %p124 = scmp.ne.s32.totalorder %s115, %s116
      %p125 = scmp.eq.s32.totalorder %s28, 0
      %p126 = por %p124, %p125
      %p127 = scmp.ne.s32.totalorder %s115, %s116
      %p128 = scmp.eq.s32.totalorder %s29, 1
      %p129 = por %p127, %p128
      %p131 = scmp.ne.s32.totalorder %s116, %s130
      %p132 = scmp.eq.s32.totalorder %s29, 0
      %p133 = por %p131, %p132
      %s135 = sadd.s32 %s134, 1
      %p138 = scmp.eq.s32.totalorder %s23, 1
      %p139 = scmp.ne.s32.totalorder %s134, %s136
      %p140 = scmp.eq.s32.totalorder %s23, 0
      %p141 = por %p139, %p140
      %p142 = scmp.ne.s32.totalorder %s134, %s136
      %p143 = scmp.eq.s32.totalorder %s28, 1
      %p144 = por %p142, %p143
      %p145 = scmp.ne.s32.totalorder %s136, %s137
      %p146 = scmp.eq.s32.totalorder %s28, 0
      %p147 = por %p145, %p146
      %p148 = scmp.ne.s32.totalorder %s136, %s137
      %p149 = scmp.eq.s32.totalorder %s29, 1
      %p150 = por %p148, %p149
      %p152 = scmp.ne.s32.totalorder %s137, %s151
      %p153 = scmp.eq.s32.totalorder %s29, 0
      %p154 = por %p152, %p153
      %s156 = sadd.s32 %s155, 1
      %p159 = scmp.eq.s32.totalorder %s23, 1
      %p160 = scmp.ne.s32.totalorder %s155, %s157
      %p161 = scmp.eq.s32.totalorder %s23, 0
      %p162 = por %p160, %p161
      %p163 = scmp.ne.s32.totalorder %s155, %s157
      %p164 = scmp.eq.s32.totalorder %s28, 1
      %p165 = por %p163, %p164
      %p166 = scmp.ne.s32.totalorder %s157, %s158
      %p167 = scmp.eq.s32.totalorder %s28, 0
      %p168 = por %p166, %p167
      %p169 = scmp.ne.s32.totalorder %s157, %s158
      %p170 = scmp.eq.s32.totalorder %s29, 1
      %p171 = por %p169, %p170
      %p173 = scmp.ne.s32.totalorder %s158, %s172
      %p174 = scmp.eq.s32.totalorder %s29, 0
      %p175 = por %p173, %p174
      %s177 = sadd.s32 %s176, 1
      %p180 = scmp.eq.s32.totalorder %s23, 1
      %p181 = scmp.ne.s32.totalorder %s176, %s178
      %p182 = scmp.eq.s32.totalorder %s23, 0
      %p183 = por %p181, %p182
      %p184 = scmp.ne.s32.totalorder %s176, %s178
      %p185 = scmp.eq.s32.totalorder %s28, 1
      %p186 = por %p184, %p185
      %p187 = scmp.ne.s32.totalorder %s178, %s179
      %p188 = scmp.eq.s32.totalorder %s28, 0
      %p189 = por %p187, %p188
      %p190 = scmp.ne.s32.totalorder %s178, %s179
      %p191 = scmp.eq.s32.totalorder %s29, 1
      %p192 = por %p190, %p191
      %p194 = scmp.ne.s32.totalorder %s179, %s193
      %p195 = scmp.eq.s32.totalorder %s29, 0
      %p196 = por %p194, %p195
      %s197 = ssub.s32 %s30, %s42
      %s198 = ssub.s32 %s31, %s38
      %s199 = sor.u32 %s197, %s198
      %p200 = scmp.eq.s32.totalorder %s199, 0
      %s202 = sadd.s32 %s201, 1
      %s203 = scalar_select %p200, %s201, %s202
      %p206 = pneg %p200
      %p207 = scmp.eq.s32.totalorder %s23, 1
      %p208 = por %p206, %p207
      %p209 = scmp.ne.s32.totalorder %s201, %s204
      %p210 = scmp.eq.s32.totalorder %s23, 0
      %p211 = por %p209, %p210
      %p212 = scmp.ne.s32.totalorder %s201, %s204
      %p213 = scmp.eq.s32.totalorder %s28, 1
      %p214 = por %p212, %p213
      %p215 = scmp.ne.s32.totalorder %s204, %s205
      %p216 = scmp.eq.s32.totalorder %s28, 0
      %p217 = por %p215, %p216
      %p218 = scmp.ne.s32.totalorder %s204, %s205
      %p219 = scmp.eq.s32.totalorder %s29, 1
      %p220 = por %p218, %p219
      %p222 = scmp.ne.s32.totalorder %s205, %s221
      %p223 = scmp.eq.s32.totalorder %s29, 0
      %p224 = por %p222, %p223
      %s225 = ssub.s32 %s30, %s42
      %s226 = ssub.s32 %s31, %s38
      %s227 = sor.u32 %s225, %s226
      %p228 = scmp.eq.s32.totalorder %s227, 0
      %s230 = sadd.s32 %s229, 1
      %s231 = scalar_select %p228, %s229, %s230
      %p234 = pneg %p228
      %p235 = scmp.eq.s32.totalorder %s23, 1
      %p236 = por %p234, %p235
      %p237 = scmp.ne.s32.totalorder %s229, %s232
      %p238 = scmp.eq.s32.totalorder %s23, 0
      %p239 = por %p237, %p238
      %p240 = scmp.ne.s32.totalorder %s229, %s232
      %p241 = scmp.eq.s32.totalorder %s28, 1
      %p242 = por %p240, %p241
      %p243 = scmp.ne.s32.totalorder %s232, %s233
      %p244 = scmp.eq.s32.totalorder %s28, 0
      %p245 = por %p243, %p244
      %p246 = scmp.ne.s32.totalorder %s232, %s233
      %p247 = scmp.eq.s32.totalorder %s29, 1
      %p248 = por %p246, %p247
      %p250 = scmp.ne.s32.totalorder %s233, %s249
      %p251 = scmp.eq.s32.totalorder %s29, 0
      %p252 = por %p250, %p251
      %s253 = ssub.s32 %s30, %s42
      %s254 = ssub.s32 %s31, %s38
      %s255 = sor.u32 %s253, %s254
      %p256 = scmp.eq.s32.totalorder %s255, 0
      %s258 = sadd.s32 %s257, 1
      %s259 = scalar_select %p256, %s257, %s258
      %p262 = pneg %p256
      %p263 = scmp.eq.s32.totalorder %s23, 1
      %p264 = por %p262, %p263
      %p265 = scmp.ne.s32.totalorder %s257, %s260
      %p266 = scmp.eq.s32.totalorder %s23, 0
      %p267 = por %p265, %p266
      %p268 = scmp.ne.s32.totalorder %s257, %s260
      %p269 = scmp.eq.s32.totalorder %s28, 1
      %p270 = por %p268, %p269
      %p271 = scmp.ne.s32.totalorder %s260, %s261
      %p272 = scmp.eq.s32.totalorder %s28, 0
      %p273 = por %p271, %p272
      %p274 = scmp.ne.s32.totalorder %s260, %s261
      %p275 = scmp.eq.s32.totalorder %s29, 1
      %p276 = por %p274, %p275
      %p278 = scmp.ne.s32.totalorder %s261, %s277
      %p279 = scmp.eq.s32.totalorder %s29, 0
      %p280 = por %p278, %p279
      %s281 = ssub.s32 %s30, %s42
      %s282 = ssub.s32 %s31, %s38
      %s283 = sor.u32 %s281, %s282
      %p284 = scmp.eq.s32.totalorder %s283, 0
      %s286 = sadd.s32 %s285, 1
      %s287 = scalar_select %p284, %s285, %s286
      %p290 = pneg %p284
      %p291 = scmp.eq.s32.totalorder %s23, 1
      %p292 = por %p290, %p291
      %p293 = scmp.ne.s32.totalorder %s285, %s288
      %p294 = scmp.eq.s32.totalorder %s23, 0
      %p295 = por %p293, %p294
      %p296 = scmp.ne.s32.totalorder %s285, %s288
      %p297 = scmp.eq.s32.totalorder %s28, 1
      %p298 = por %p296, %p297
      %p299 = scmp.ne.s32.totalorder %s288, %s289
      %p300 = scmp.eq.s32.totalorder %s28, 0
      %p301 = por %p299, %p300
      %p302 = scmp.ne.s32.totalorder %s288, %s289
      %p303 = scmp.eq.s32.totalorder %s29, 1
      %p304 = por %p302, %p303
      %p306 = scmp.ne.s32.totalorder %s289, %s305
      %p307 = scmp.eq.s32.totalorder %s29, 0
      %p308 = por %p306, %p307
      %p309 = scmp.le.s32.totalorder 1, %s23
      %p310 = scmp.lt.s32.totalorder %s23, 3
      %p311 = pnand %p309, %p310
      %p312 = pneg %p311
      // Predicated region
      $region9: #{tpu_custom_call.1} parent=5 // pred_check
        _
      $region10: #{tpu_custom_call.1} parent=5 // pred_check_branch
        %314 = sbr.rel (%p311) target = $region12
      $region11: #{tpu_custom_call.1} parent=5 // pred_region
        %s315 = ssub.s32 %s23, 1
        // Predicated region
        $region13: #{tpu_custom_call.1} parent=11 // pred_check
          %p316 = pneg %p84
        $region14: #{tpu_custom_call.1} parent=11 // pred_check_branch
          %318 = sbr.rel (%p316) target = $region16
        $region15: #{tpu_custom_call.1} parent=11 // pred_region
          _
        $region16: #{tpu_custom_call.1} parent=11 // pred_fallthru
          _
        // Predicated region
        $region17: #{tpu_custom_call.1} parent=11 // pred_check
          %p319 = pneg %p105
        $region18: #{tpu_custom_call.1} parent=11 // pred_check_branch
          %321 = sbr.rel (%p319) target = $region20
        $region19: #{tpu_custom_call.1} parent=11 // pred_region
          _
        $region20: #{tpu_custom_call.1} parent=11 // pred_fallthru
          _
        // Predicated region
        $region21: #{tpu_custom_call.1} parent=11 // pred_check
          %p322 = pneg %p126
        $region22: #{tpu_custom_call.1} parent=11 // pred_check_branch
          %324 = sbr.rel (%p322) target = $region24
        $region23: #{tpu_custom_call.1} parent=11 // pred_region
          _
        $region24: #{tpu_custom_call.1} parent=11 // pred_fallthru
          _
        // Predicated region
        $region25: #{tpu_custom_call.1} parent=11 // pred_check
          %p325 = pneg %p147
        $region26: #{tpu_custom_call.1} parent=11 // pred_check_branch
          %327 = sbr.rel (%p325) target = $region28
        $region27: #{tpu_custom_call.1} parent=11 // pred_region
          _
        $region28: #{tpu_custom_call.1} parent=11 // pred_fallthru
          _
        // Predicated region
        $region29: #{tpu_custom_call.1} parent=11 // pred_check
          %p328 = pneg %p168
        $region30: #{tpu_custom_call.1} parent=11 // pred_check_branch
          %330 = sbr.rel (%p328) target = $region32
        $region31: #{tpu_custom_call.1} parent=11 // pred_region
          _
        $region32: #{tpu_custom_call.1} parent=11 // pred_fallthru
          _
        // Predicated region
        $region33: #{tpu_custom_call.1} parent=11 // pred_check
          %p331 = pneg %p189
        $region34: #{tpu_custom_call.1} parent=11 // pred_check_branch
          %333 = sbr.rel (%p331) target = $region36
        $region35: #{tpu_custom_call.1} parent=11 // pred_region
          _
        $region36: #{tpu_custom_call.1} parent=11 // pred_fallthru
          _
      $region12: #{tpu_custom_call.1} parent=5 // pred_fallthru
        _
      %p334 = scmp.lt.s32.totalorder %s23, 2
      // Predicated region
      $region37: #{tpu_custom_call.1} parent=5 // pred_check
        %p335 = pneg %p334
      $region38: #{tpu_custom_call.1} parent=5 // pred_check_branch
        %337 = sbr.rel (%p335) target = $region40
      $region39: #{tpu_custom_call.1} parent=5 // pred_region
        // Predicated region
        $region41: #{tpu_custom_call.1} parent=39 // pred_check
          %p338 = pneg %p57
        $region42: #{tpu_custom_call.1} parent=39 // pred_check_branch
          %340 = sbr.rel (%p338) target = $region44
        $region43: #{tpu_custom_call.1} parent=39 // pred_region
          %p341 = scmp.lt.s32.totalorder %s30, 1
          %s342 = scalar_select %p341, %s30, 1
          %p343 = scmp.lt.s32.totalorder %s31, 0
          %s344 = scalar_select %p343, %s31, 0
          %s345 = smul.addr %s342, 4
          %s346 = sadd.s32 %s344, %s345
          %s347 = smul.addr %s346, 8
          %s348 = scalar_lea.vmem %s0, %s347
        $region44: #{tpu_custom_call.1} parent=39 // pred_fallthru
          _
      $region40: #{tpu_custom_call.1} parent=5 // pred_fallthru
        _
      %p349 = scmp.le.s32.totalorder 1, %s23
      %p350 = scmp.lt.s32.totalorder %s23, 3
      %p351 = pnand %p349, %p350
      %p352 = pneg %p351
      // Predicated region
      $region45: #{tpu_custom_call.1} parent=5 // pred_check
        _
      $region46: #{tpu_custom_call.1} parent=5 // pred_check_branch
        %354 = sbr.rel (%p351) target = $region48
      $region47: #{tpu_custom_call.1} parent=5 // pred_region
        %s355 = ssub.s32 %s23, 1
        %p356 = scmp.lt.s32.totalorder %s32, 1
        %s357 = scalar_select %p356, %s32, 1
        %p358 = scmp.lt.s32.totalorder %s33, 0
        %s359 = scalar_select %p358, %s33, 0
        %s360 = smul.addr %s357, 4
        %s361 = sadd.s32 %s359, %s360
        %s362 = smul.addr %s361, 8
        %s363 = scalar_lea.vmem %s0, %s362
        %p364 = pneg %p63
        %p365 = pneg %p60
        %p366 = pneg %p84
        %p367 = pneg %p81
        %p368 = pneg %p105
        %p369 = pneg %p102
        %p370 = pneg %p126
        %p371 = pneg %p123
        %p372 = pneg %p147
        %p373 = pneg %p144
        %p374 = pneg %p168
        %p375 = pneg %p165
        %p376 = pneg %p189
        %p377 = pneg %p186
        %p378 = pneg %p217
        %p379 = pneg %p214
        %s380 = sand.u32 %s204, 1
        %s381 = scalar_lea.sflag [#allocation3], %s380
        %s382 = sand.u32 %s204, 1
        %s383 = smul.addr %s382, 32
        %s384 = scalar_lea.vmem [#allocation2], %s383
        %p385 = pneg %p245
        %p386 = pneg %p242
        %s387 = sand.u32 %s232, 1
        %s388 = scalar_lea.sflag [#allocation5], %s387
        %s389 = sand.u32 %s232, 1
        %s390 = scalar_lea.vmem [#allocation4], %s389
        %p391 = pneg %p273
        %p392 = pneg %p270
        %p393 = scmp.lt.s32.totalorder %s32, 1
        %s394 = scalar_select %p393, %s32, 1
        %p395 = scmp.lt.s32.totalorder %s33, 0
        %s396 = scalar_select %p395, %s33, 0
        %s397 = sadd.s32 %s396, %s394
        %s398 = scalar_lea.vmem %s9, %s397
        %p399 = pneg %p301
        %p400 = pneg %p298
        %p401 = scmp.lt.s32.totalorder %s32, 1
        %s402 = scalar_select %p401, %s32, 1
        %p403 = scmp.lt.s32.totalorder %s33, 0
        %s404 = scalar_select %p403, %s33, 0
        %s405 = smul.addr %s404, 8
        %s406 = smul.addr %s402, 8
        %s407 = sadd.s32 %s405, %s406
        %s408 = smul.addr %s407, 8
        %s409 = scalar_lea.vmem %s10, %s408
        %p410 = scmp.lt.s32.totalorder %s32, 1
        %s411 = scalar_select %p410, %s32, 1
        %p412 = scmp.lt.s32.totalorder %s33, 0
        %s413 = scalar_select %p412, %s33, 0
        %s414 = smul.addr %s411, 4
        %s415 = sadd.s32 %s413, %s414
        %s416 = smul.addr %s415, 8
        %s417 = scalar_lea.vmem %s0, %s416
        %p418 = scmp.lt.s32.totalorder %s32, 1
        %s419 = scalar_select %p418, %s32, 1
        %p420 = scmp.lt.s32.totalorder %s33, 0
        %s421 = scalar_select %p420, %s33, 0
        %s422 = sadd.s32 %s421, %s419
        %s423 = scalar_lea.vmem %s9, %s422
        %p424 = scmp.lt.s32.totalorder %s32, 1
        %s425 = scalar_select %p424, %s32, 1
        %p426 = scmp.lt.s32.totalorder %s33, 0
        %s427 = scalar_select %p426, %s33, 0
        %s428 = smul.addr %s427, 8
        %s429 = smul.addr %s425, 8
        %s430 = sadd.s32 %s428, %s429
        %s431 = smul.addr %s430, 8
        %s432 = scalar_lea.vmem %s10, %s431
        %v433 = vld [vmem:[%s417] sm:$0xff]
        %v434 = vld [vmem:[%s417 + $0x8] sm:$0xff]
        %v435 = vld [vmem:[%s417 + $0x10] sm:$0xff]
        %v436 = vld [vmem:[%s417 + $0x18] sm:$0xff]
        %v437 = vld [vmem:[%s1] sm:$0xff]
        %v438 = vld [vmem:[%s1 + $0x8] sm:$0xff]
        %v439 = vld [vmem:[%s2] sm:$0xff]
        %v440 = vld [vmem:[%s2 + $0x8] sm:$0xff]
        %442 = vset.pattern.permute.xlu0 0
        %443 = vperm.xlu0 %442, %v439
        %v444 = vpop.permute.xlu0 %443
        %447 = vset.pattern.permute.xlu0 0
        %448 = vperm.xlu0 %447, %v440
        %v449 = vpop.permute.xlu0 %448
        %vm451 = vcmask 261120
        %v453 = vsel %vm451, %v437, 0
        %v456 = vsel %vm451, %v438, 0
        %458 = vmatprep.subr.mxu0 0.0
        %459 = vmatpush1.msra.mxu0 %v433
        %460 = vmatprep.subr.mxu0 0.0
        %461 = vmatpush1.msra.mxu0 %v434
        %462 = vmatprep.subr.mxu0 0.0
        %463 = vmatpush1.msra.mxu0 %v435
        %464 = vmatprep.subr.mxu0 0.0
        %465 = vmatpush1.msra.mxu0 %v436
        %466 = vmatprep.subr.mxu0 0.0
        %467 = vmatpush1.msra.mxu0 0.0
        %468 = vmatprep.subr.mxu0 0.0
        %469 = vmatpush1.msra.mxu0 0.0
        %470 = vmatprep.subr.mxu0 0.0
        %471 = vmatpush1.msra.mxu0 0.0
        %472 = vmatprep.subr.mxu0 0.0
        %473 = vmatpush1.msra.mxu0 0.0
        %474 = vmatprep.subr.mxu0 0.0
        %475 = vmatpush1.msra.mxu0 0.0
        %476 = vmatprep.subr.mxu0 0.0
        %477 = vmatpush1.msra.mxu0 0.0
        %478 = vmatprep.subr.mxu0 0.0
        %479 = vmatpush1.msra.mxu0 0.0
        %480 = vmatprep.subr.mxu0 0.0
        %481 = vmatpush1.msra.mxu0 0.0
        %482 = vmatprep.subr.mxu0 0.0
        %483 = vmatpush1.msra.mxu0 0.0
        %484 = vmatprep.subr.mxu0 0.0
        %485 = vmatpush1.msra.mxu0 0.0
        %486 = vmatprep.subr.mxu0 0.0
        %487 = vmatpush1.msra.mxu0 0.0
        %488 = vmatprep.subr.mxu0 0.0
        %489 = vmatpush1.msra.mxu0 0.0
        %490 = vmatprep.subr.mxu0 0.0
        %491 = vmatpush1.msra.mxu0 0.0
        %492 = vmatprep.subr.mxu0 0.0
        %493 = vmatpush1.msra.mxu0 0.0
        %494 = vmatprep.subr.mxu0 0.0
        %495 = vmatpush1.msra.mxu0 0.0
        %496 = vmatprep.subr.mxu0 0.0
        %497 = vmatpush1.msra.mxu0 0.0
        %498 = vmatprep.subr.mxu0 0.0
        %499 = vmatpush1.msra.mxu0 0.0
        %500 = vmatprep.subr.mxu0 0.0
        %501 = vmatpush1.msra.mxu0 0.0
        %502 = vmatprep.subr.mxu0 0.0
        %503 = vmatpush1.msra.mxu0 0.0
        %504 = vmatprep.subr.mxu0 0.0
        %505 = vmatpush1.msra.mxu0 0.0
        %506 = vmatprep.subr.mxu0 0.0
        %507 = vmatpush1.msra.mxu0 0.0
        %508 = vmatprep.subr.mxu0 0.0
        %509 = vmatpush1.msra.mxu0 0.0
        %510 = vmatprep.subr.mxu0 0.0
        %511 = vmatpush1.msra.mxu0 0.0
        %512 = vmatprep.subr.mxu0 0.0
        %513 = vmatpush1.msra.mxu0 0.0
        %514 = vmatprep.subr.mxu0 0.0
        %515 = vmatpush1.msra.mxu0 0.0
        %516 = vmatprep.subr.mxu0 0.0
        %517 = vmatpush1.msra.mxu0 0.0
        %518 = vmatprep.subr.mxu0 0.0
        %519 = vmatpush1.msra.mxu0 0.0
        %520 = vmatprep.subr.mxu0 0.0
        %521 = vmatpush1.msra.mxu0 0.0
        %522 = vmatprep.mubr.f32.mxu0 0.0
        %523 = vmatmul.mubr.f32.gmra.mrb[0].mxu0 %v453
        %v524 = vpop.f32.mrb[0].mxu0
        %v525 = vadd.f32 %v444, %v524
        %v526 = vpop.f32.mrb[0].mxu0
        %527 = vmatprep.mubr.f32.mxu0 0.0
        %528 = vmatmul.mubr.f32.gmra.mrb[0].mxu0 %v456
        %v529 = vpop.f32.mrb[0].mxu0
        %v530 = vadd.f32 %v449, %v529
        %v531 = vpop.f32.mrb[0].mxu0
        %532 = vdwg.mxu0
        %v533 = vld [vmem:[%s3] sm:$0xff]
        %v534 = vld [vmem:[%s3 + $0x8] sm:$0xff]
        %v535 = vld [vmem:[%s3 + $0x10] sm:$0xff]
        %v536 = vld [vmem:[%s3 + $0x18] sm:$0xff]
        %v537 = vld [vmem:[%s3 + $0x20] sm:$0xff]
        %v538 = vld [vmem:[%s3 + $0x28] sm:$0xff]
        %v539 = vld [vmem:[%s3 + $0x30] sm:$0xff]
        %v540 = vld [vmem:[%s3 + $0x38] sm:$0xff]
        %v541 = vld [vmem:[%s4] sm:$0xff]
        %v542 = vld [vmem:[%s4 + $0x8] sm:$0xff]
        %v543 = vld [vmem:[%s4 + $0x10] sm:$0xff]
        %v544 = vld [vmem:[%s4 + $0x18] sm:$0xff]
        %v545 = vld [vmem:[%s4 + $0x20] sm:$0xff]
        %v546 = vld [vmem:[%s4 + $0x28] sm:$0xff]
        %v547 = vld [vmem:[%s4 + $0x30] sm:$0xff]
        %v548 = vld [vmem:[%s4 + $0x38] sm:$0xff]
        %550 = vset.pattern.permute.xlu0 0
        %551 = vperm.xlu0 %550, %v541
        %v552 = vpop.permute.xlu0 %551
        %555 = vset.pattern.permute.xlu0 0
        %556 = vperm.xlu0 %555, %v542
        %v557 = vpop.permute.xlu0 %556
        %560 = vset.pattern.permute.xlu0 0
        %561 = vperm.xlu0 %560, %v543
        %v562 = vpop.permute.xlu0 %561
        %565 = vset.pattern.permute.xlu0 0
        %566 = vperm.xlu0 %565, %v544
        %v567 = vpop.permute.xlu0 %566
        %570 = vset.pattern.permute.xlu0 0
        %571 = vperm.xlu0 %570, %v545
        %v572 = vpop.permute.xlu0 %571
        %575 = vset.pattern.permute.xlu0 0
        %576 = vperm.xlu0 %575, %v546
        %v577 = vpop.permute.xlu0 %576
        %580 = vset.pattern.permute.xlu0 0
        %581 = vperm.xlu0 %580, %v547
        %v582 = vpop.permute.xlu0 %581
        %585 = vset.pattern.permute.xlu0 0
        %586 = vperm.xlu0 %585, %v548
        %v587 = vpop.permute.xlu0 %586
        %vm589 = vcmask 130048
        %v591 = vsel %vm589, %v533, 0
        %v594 = vsel %vm589, %v534, 0
        %v597 = vsel %vm589, %v535, 0
        %v600 = vsel %vm589, %v536, 0
        %v603 = vsel %vm589, %v537, 0
        %v606 = vsel %vm589, %v538, 0
        %v609 = vsel %vm589, %v539, 0
        %v612 = vsel %vm589, %v540, 0
        %614 = vmatprep.subr.mxu0 0.0
        %615 = vmatpush1.msra.mxu0 %v525
        %616 = vmatprep.subr.mxu0 0.0
        %617 = vmatpush1.msra.mxu0 %v530
        %618 = vmatprep.subr.mxu0 0.0
        %619 = vmatpush1.msra.mxu0 0.0
        %620 = vmatprep.subr.mxu0 0.0
        %621 = vmatpush1.msra.mxu0 0.0
        %622 = vmatprep.subr.mxu0 0.0
        %623 = vmatpush1.msra.mxu0 0.0
        %624 = vmatprep.subr.mxu0 0.0
        %625 = vmatpush1.msra.mxu0 0.0
        %626 = vmatprep.subr.mxu0 0.0
        %627 = vmatpush1.msra.mxu0 0.0
        %628 = vmatprep.subr.mxu0 0.0
        %629 = vmatpush1.msra.mxu0 0.0
        %630 = vmatprep.subr.mxu0 0.0
        %631 = vmatpush1.msra.mxu0 0.0
        %632 = vmatprep.subr.mxu0 0.0
        %633 = vmatpush1.msra.mxu0 0.0
        %634 = vmatprep.subr.mxu0 0.0
        %635 = vmatpush1.msra.mxu0 0.0
        %636 = vmatprep.subr.mxu0 0.0
        %637 = vmatpush1.msra.mxu0 0.0
        %638 = vmatprep.subr.mxu0 0.0
        %639 = vmatpush1.msra.mxu0 0.0
        %640 = vmatprep.subr.mxu0 0.0
        %641 = vmatpush1.msra.mxu0 0.0
        %642 = vmatprep.subr.mxu0 0.0
        %643 = vmatpush1.msra.mxu0 0.0
        %644 = vmatprep.subr.mxu0 0.0
        %645 = vmatpush1.msra.mxu0 0.0
        %646 = vmatprep.subr.mxu0 0.0
        %647 = vmatpush1.msra.mxu0 0.0
        %648 = vmatprep.subr.mxu0 0.0
        %649 = vmatpush1.msra.mxu0 0.0
        %650 = vmatprep.subr.mxu0 0.0
        %651 = vmatpush1.msra.mxu0 0.0
        %652 = vmatprep.subr.mxu0 0.0
        %653 = vmatpush1.msra.mxu0 0.0
        %654 = vmatprep.subr.mxu0 0.0
        %655 = vmatpush1.msra.mxu0 0.0
        %656 = vmatprep.subr.mxu0 0.0
        %657 = vmatpush1.msra.mxu0 0.0
        %658 = vmatprep.subr.mxu0 0.0
        %659 = vmatpush1.msra.mxu0 0.0
        %660 = vmatprep.subr.mxu0 0.0
        %661 = vmatpush1.msra.mxu0 0.0
        %662 = vmatprep.subr.mxu0 0.0
        %663 = vmatpush1.msra.mxu0 0.0
        %664 = vmatprep.subr.mxu0 0.0
        %665 = vmatpush1.msra.mxu0 0.0
        %666 = vmatprep.subr.mxu0 0.0
        %667 = vmatpush1.msra.mxu0 0.0
        %668 = vmatprep.subr.mxu0 0.0
        %669 = vmatpush1.msra.mxu0 0.0
        %670 = vmatprep.subr.mxu0 0.0
        %671 = vmatpush1.msra.mxu0 0.0
        %672 = vmatprep.subr.mxu0 0.0
        %673 = vmatpush1.msra.mxu0 0.0
        %674 = vmatprep.subr.mxu0 0.0
        %675 = vmatpush1.msra.mxu0 0.0
        %676 = vmatprep.subr.mxu0 0.0
        %677 = vmatpush1.msra.mxu0 0.0
        %678 = vmatprep.mubr.f32.mxu0 0.0
        %679 = vmatmul.mubr.f32.gmra.mrb[0].mxu0 %v591
        %v680 = vpop.f32.mrb[0].mxu0
        %v681 = vadd.f32 %v552, %v680
        %v682 = vpop.f32.mrb[0].mxu0
        %683 = vmatprep.mubr.f32.mxu0 0.0
        %684 = vmatmul.mubr.f32.gmra.mrb[0].mxu0 %v594
        %v685 = vpop.f32.mrb[0].mxu0
        %v686 = vadd.f32 %v557, %v685
        %v687 = vpop.f32.mrb[0].mxu0
        %688 = vmatprep.mubr.f32.mxu0 0.0
        %689 = vmatmul.mubr.f32.gmra.mrb[0].mxu0 %v597
        %v690 = vpop.f32.mrb[0].mxu0
        %v691 = vadd.f32 %v562, %v690
        %v692 = vpop.f32.mrb[0].mxu0
        %693 = vmatprep.mubr.f32.mxu0 0.0
        %694 = vmatmul.mubr.f32.gmra.mrb[0].mxu0 %v600
        %v695 = vpop.f32.mrb[0].mxu0
        %v696 = vadd.f32 %v567, %v695
        %v697 = vpop.f32.mrb[0].mxu0
        %698 = vmatprep.mubr.f32.mxu0 0.0
        %699 = vmatmul.mubr.f32.gmra.mrb[0].mxu0 %v603
        %v700 = vpop.f32.mrb[0].mxu0
        %v701 = vadd.f32 %v572, %v700
        %v702 = vpop.f32.mrb[0].mxu0
        %703 = vmatprep.mubr.f32.mxu0 0.0
        %704 = vmatmul.mubr.f32.gmra.mrb[0].mxu0 %v606
        %v705 = vpop.f32.mrb[0].mxu0
        %v706 = vadd.f32 %v577, %v705
        %v707 = vpop.f32.mrb[0].mxu0
        %708 = vmatprep.mubr.f32.mxu0 0.0
        %709 = vmatmul.mubr.f32.gmra.mrb[0].mxu0 %v609
        %v710 = vpop.f32.mrb[0].mxu0
        %v711 = vadd.f32 %v582, %v710
        %v712 = vpop.f32.mrb[0].mxu0
        %713 = vmatprep.mubr.f32.mxu0 0.0
        %714 = vmatmul.mubr.f32.gmra.mrb[0].mxu0 %v612
        %v715 = vpop.f32.mrb[0].mxu0
        %v716 = vadd.f32 %v587, %v715
        %v717 = vpop.f32.mrb[0].mxu0
        %718 = vdwg.mxu0
        %vm719 = vcmask 523264
        %v720 = vsel %vm719, %v681, inf
        %v721 = vsel %vm719, %v686, inf
        %v722 = vsel %vm719, %v691, inf
        %v723 = vsel %vm719, %v696, inf
        %v724 = vsel %vm719, %v701, inf
        %v725 = vmin.f32 %v720, %v724
        %v726 = vsel %vm719, %v706, inf
        %v727 = vmin.f32 %v721, %v726
        %v728 = vsel %vm719, %v711, inf
        %v729 = vmin.f32 %v722, %v728
        %v730 = vsel %vm719, %v716, inf
        %v731 = vmin.f32 %v723, %v730
        %v732 = vmin.f32 %v725, %v727
        %v733 = vmin.f32 %v729, %v731
        %v734 = vmin.f32 %v732, %v733
        %v735 = vrot.slane %v734, 4
        %v736 = vmin.f32 %v734, %v735
        %v737 = vrot.slane %v736, 2
        %v738 = vmin.f32 %v736, %v737
        %v739 = vrot.slane %v738, 1
        %v740 = vmin.f32 %v738, %v739
        %v741 = vlaneseq
        %v742 = vshrl.u32 %v741, 7
        %v743 = vadd.s32 %v742, 8
        %v744 = vadd.s32 %v742, 16
        %v745 = vadd.s32 %v742, 24
        %v746 = vadd.s32 %v742, 32
        %v747 = vadd.s32 %v742, 40
        %v748 = vadd.s32 %v742, 48
        %v749 = vadd.s32 %v742, 56
        %vm750 = vcmp.le.f32.partialorder %v681, %v740
        %vm751 = vcmp.le.f32.partialorder %v686, %v740
        %vm752 = vcmp.le.f32.partialorder %v691, %v740
        %vm753 = vcmp.le.f32.partialorder %v696, %v740
        %vm754 = vcmp.le.f32.partialorder %v701, %v740
        %vm755 = vcmp.le.f32.partialorder %v706, %v740
        %vm756 = vcmp.le.f32.partialorder %v711, %v740
        %vm757 = vcmp.le.f32.partialorder %v716, %v740
        %v758 = vsel %vm750, %v742, 64
        %v759 = vsel %vm751, %v743, 64
        %v760 = vsel %vm752, %v744, 64
        %v761 = vsel %vm753, %v745, 64
        %v762 = vsel %vm754, %v746, 64
        %v763 = vsel %vm755, %v747, 64
        %v764 = vsel %vm756, %v748, 64
        %v765 = vsel %vm757, %v749, 64
        %v766 = vsel %vm719, %v758, 2147483647
        %v767 = vsel %vm719, %v759, 2147483647
        %v768 = vsel %vm719, %v760, 2147483647
        %v769 = vsel %vm719, %v761, 2147483647
        %v770 = vsel %vm719, %v762, 2147483647
        %vm771 = vcmp.lt.s32.totalorder %v766, %v770
        %v772 = vsel %vm771, %v766, %v770
        %v773 = vsel %vm719, %v763, 2147483647
        %vm774 = vcmp.lt.s32.totalorder %v767, %v773
        %v775 = vsel %vm774, %v767, %v773
        %v776 = vsel %vm719, %v764, 2147483647
        %vm777 = vcmp.lt.s32.totalorder %v768, %v776
        %v778 = vsel %vm777, %v768, %v776
        %v779 = vsel %vm719, %v765, 2147483647
        %vm780 = vcmp.lt.s32.totalorder %v769, %v779
        %v781 = vsel %vm780, %v769, %v779
        %vm782 = vcmp.lt.s32.totalorder %v772, %v775
        %v783 = vsel %vm782, %v772, %v775
        %vm784 = vcmp.lt.s32.totalorder %v778, %v781
        %v785 = vsel %vm784, %v778, %v781
        %vm786 = vcmp.lt.s32.totalorder %v783, %v785
        %v787 = vsel %vm786, %v783, %v785
        %v788 = vrot.slane %v787, 4
        %vm789 = vcmp.lt.s32.totalorder %v787, %v788
        %v790 = vsel %vm789, %v787, %v788
        %v791 = vrot.slane %v790, 2
        %vm792 = vcmp.lt.s32.totalorder %v790, %v791
        %v793 = vsel %vm792, %v790, %v791
        %v794 = vrot.slane %v793, 1
        %vm795 = vcmp.lt.s32.totalorder %v793, %v794
        %v796 = vsel %vm795, %v793, %v794
        %vm797 = vcmp.eq.s32.totalorder %v742, %v796
        %vm798 = vcmp.eq.s32.totalorder %v743, %v796
        %vm799 = vcmp.eq.s32.totalorder %v744, %v796
        %vm800 = vcmp.eq.s32.totalorder %v745, %v796
        %vm801 = vcmp.eq.s32.totalorder %v746, %v796
        %vm802 = vcmp.eq.s32.totalorder %v747, %v796
        %vm803 = vcmp.eq.s32.totalorder %v748, %v796
        %vm804 = vcmp.eq.s32.totalorder %v749, %v796
        %v805 = vsel %vm797, 1, 0
        %v806 = vsel %vm798, 1, 0
        %v807 = vsel %vm799, 1, 0
        %v808 = vsel %vm800, 1, 0
        %v809 = vsel %vm801, 1, 0
        %v810 = vsel %vm802, 1, 0
        %v811 = vsel %vm803, 1, 0
        %v812 = vsel %vm804, 1, 0
        %v813 = vcvt.s32.f32 %v805
        %v814 = vcvt.s32.f32 %v806
        %v815 = vcvt.s32.f32 %v807
        %v816 = vcvt.s32.f32 %v808
        %v817 = vcvt.s32.f32 %v809
        %v818 = vcvt.s32.f32 %v810
        %v819 = vcvt.s32.f32 %v811
        %v820 = vcvt.s32.f32 %v812
        %v821 = vmul.f32 %v525, %v525
        %v822 = vmul.f32 %v530, %v530
        %v824 = vsel %vm589, 1.0, 0
        %826 = vmatprep.subr.mxu0 0.0
        %827 = vmatpush1.msra.mxu0 %v821
        %828 = vmatprep.subr.mxu0 0.0
        %829 = vmatpush1.msra.mxu0 %v822
        %830 = vmatprep.subr.mxu0 0.0
        %831 = vmatpush1.msra.mxu0 0.0
        %832 = vmatprep.subr.mxu0 0.0
        %833 = vmatpush1.msra.mxu0 0.0
        %834 = vmatprep.subr.mxu0 0.0
        %835 = vmatpush1.msra.mxu0 0.0
        %836 = vmatprep.subr.mxu0 0.0
        %837 = vmatpush1.msra.mxu0 0.0
        %838 = vmatprep.subr.mxu0 0.0
        %839 = vmatpush1.msra.mxu0 0.0
        %840 = vmatprep.subr.mxu0 0.0
        %841 = vmatpush1.msra.mxu0 0.0
        %842 = vmatprep.subr.mxu0 0.0
        %843 = vmatpush1.msra.mxu0 0.0
        %844 = vmatprep.subr.mxu0 0.0
        %845 = vmatpush1.msra.mxu0 0.0
        %846 = vmatprep.subr.mxu0 0.0
        %847 = vmatpush1.msra.mxu0 0.0
        %848 = vmatprep.subr.mxu0 0.0
        %849 = vmatpush1.msra.mxu0 0.0
        %850 = vmatprep.subr.mxu0 0.0
        %851 = vmatpush1.msra.mxu0 0.0
        %852 = vmatprep.subr.mxu0 0.0
        %853 = vmatpush1.msra.mxu0 0.0
        %854 = vmatprep.subr.mxu0 0.0
        %855 = vmatpush1.msra.mxu0 0.0
        %856 = vmatprep.subr.mxu0 0.0
        %857 = vmatpush1.msra.mxu0 0.0
        %858 = vmatprep.subr.mxu0 0.0
        %859 = vmatpush1.msra.mxu0 0.0
        %860 = vmatprep.subr.mxu0 0.0
        %861 = vmatpush1.msra.mxu0 0.0
        %862 = vmatprep.subr.mxu0 0.0
        %863 = vmatpush1.msra.mxu0 0.0
        %864 = vmatprep.subr.mxu0 0.0
        %865 = vmatpush1.msra.mxu0 0.0
        %866 = vmatprep.subr.mxu0 0.0
        %867 = vmatpush1.msra.mxu0 0.0
        %868 = vmatprep.subr.mxu0 0.0
        %869 = vmatpush1.msra.mxu0 0.0
        %870 = vmatprep.subr.mxu0 0.0
        %871 = vmatpush1.msra.mxu0 0.0
        %872 = vmatprep.subr.mxu0 0.0
        %873 = vmatpush1.msra.mxu0 0.0
        %874 = vmatprep.subr.mxu0 0.0
        %875 = vmatpush1.msra.mxu0 0.0
        %876 = vmatprep.subr.mxu0 0.0
        %877 = vmatpush1.msra.mxu0 0.0
        %878 = vmatprep.subr.mxu0 0.0
        %879 = vmatpush1.msra.mxu0 0.0
        %880 = vmatprep.subr.mxu0 0.0
        %881 = vmatpush1.msra.mxu0 0.0
        %882 = vmatprep.subr.mxu0 0.0
        %883 = vmatpush1.msra.mxu0 0.0
        %884 = vmatprep.subr.mxu0 0.0
        %885 = vmatpush1.msra.mxu0 0.0
        %886 = vmatprep.subr.mxu0 0.0
        %887 = vmatpush1.msra.mxu0 0.0
        %888 = vmatprep.subr.mxu0 0.0
        %889 = vmatpush1.msra.mxu0 0.0
        %890 = vmatprep.mubr.f32.mxu0 0.0
        %891 = vmatmul.mubr.f32.gmra.mrb[0].mxu0 %v824
        %v892 = vpop.f32.mrb[0].mxu0
        %v893 = vadd.f32 0.0, %v892
        %v894 = vpop.f32.mrb[0].mxu0
        %895 = vdwg.mxu0
        %v896 = vadd.f32 %v740, %v893
        %v897 = vmax.f32 %v896, 0.0
        %v898 = vld [vmem:[%s5] sm:$0xff]
        %v899 = vld [vmem:[%s5 + $0x8] sm:$0xff]
        %v900 = vld [vmem:[%s5 + $0x10] sm:$0xff]
        %v901 = vld [vmem:[%s5 + $0x18] sm:$0xff]
        %v902 = vld [vmem:[%s6] sm:$0xff]
        %v903 = vld [vmem:[%s6 + $0x8] sm:$0xff]
        %v904 = vld [vmem:[%s6 + $0x10] sm:$0xff]
        %v905 = vld [vmem:[%s6 + $0x18] sm:$0xff]
        %907 = vset.pattern.permute.xlu0 0
        %908 = vperm.xlu0 %907, %v902
        %v909 = vpop.permute.xlu0 %908
        %912 = vset.pattern.permute.xlu0 0
        %913 = vperm.xlu0 %912, %v903
        %v914 = vpop.permute.xlu0 %913
        %917 = vset.pattern.permute.xlu0 0
        %918 = vperm.xlu0 %917, %v904
        %v919 = vpop.permute.xlu0 %918
        %922 = vset.pattern.permute.xlu0 0
        %923 = vperm.xlu0 %922, %v905
        %v924 = vpop.permute.xlu0 %923
        %v927 = vsel %vm719, %v898, 0
        %v930 = vsel %vm719, %v899, 0
        %v933 = vsel %vm719, %v900, 0
        %v936 = vsel %vm719, %v901, 0
        %938 = vmatprep.subr.mxu0 0.0
        %939 = vmatpush1.msra.mxu0 %v813
        %940 = vmatprep.subr.mxu0 0.0
        %941 = vmatpush1.msra.mxu0 %v814
        %942 = vmatprep.subr.mxu0 0.0
        %943 = vmatpush1.msra.mxu0 %v815
        %944 = vmatprep.subr.mxu0 0.0
        %945 = vmatpush1.msra.mxu0 %v816
        %946 = vmatprep.subr.mxu0 0.0
        %947 = vmatpush1.msra.mxu0 %v817
        %948 = vmatprep.subr.mxu0 0.0
        %949 = vmatpush1.msra.mxu0 %v818
        %950 = vmatprep.subr.mxu0 0.0
        %951 = vmatpush1.msra.mxu0 %v819
        %952 = vmatprep.subr.mxu0 0.0
        %953 = vmatpush1.msra.mxu0 %v820
        %954 = vmatprep.subr.mxu0 0.0
        %955 = vmatpush1.msra.mxu0 0.0
        %956 = vmatprep.subr.mxu0 0.0
        %957 = vmatpush1.msra.mxu0 0.0
        %958 = vmatprep.subr.mxu0 0.0
        %959 = vmatpush1.msra.mxu0 0.0
        %960 = vmatprep.subr.mxu0 0.0
        %961 = vmatpush1.msra.mxu0 0.0
        %962 = vmatprep.subr.mxu0 0.0
        %963 = vmatpush1.msra.mxu0 0.0
        %964 = vmatprep.subr.mxu0 0.0
        %965 = vmatpush1.msra.mxu0 0.0
        %966 = vmatprep.subr.mxu0 0.0
        %967 = vmatpush1.msra.mxu0 0.0
        %968 = vmatprep.subr.mxu0 0.0
        %969 = vmatpush1.msra.mxu0 0.0
        %970 = vmatprep.subr.mxu0 0.0
        %971 = vmatpush1.msra.mxu0 0.0
        %972 = vmatprep.subr.mxu0 0.0
        %973 = vmatpush1.msra.mxu0 0.0
        %974 = vmatprep.subr.mxu0 0.0
        %975 = vmatpush1.msra.mxu0 0.0
        %976 = vmatprep.subr.mxu0 0.0
        %977 = vmatpush1.msra.mxu0 0.0
        %978 = vmatprep.subr.mxu0 0.0
        %979 = vmatpush1.msra.mxu0 0.0
        %980 = vmatprep.subr.mxu0 0.0
        %981 = vmatpush1.msra.mxu0 0.0
        %982 = vmatprep.subr.mxu0 0.0
        %983 = vmatpush1.msra.mxu0 0.0
        %984 = vmatprep.subr.mxu0 0.0
        %985 = vmatpush1.msra.mxu0 0.0
        %986 = vmatprep.subr.mxu0 0.0
        %987 = vmatpush1.msra.mxu0 0.0
        %988 = vmatprep.subr.mxu0 0.0
        %989 = vmatpush1.msra.mxu0 0.0
        %990 = vmatprep.subr.mxu0 0.0
        %991 = vmatpush1.msra.mxu0 0.0
        %992 = vmatprep.subr.mxu0 0.0
        %993 = vmatpush1.msra.mxu0 0.0
        %994 = vmatprep.subr.mxu0 0.0
        %995 = vmatpush1.msra.mxu0 0.0
        %996 = vmatprep.subr.mxu0 0.0
        %997 = vmatpush1.msra.mxu0 0.0
        %998 = vmatprep.subr.mxu0 0.0
        %999 = vmatpush1.msra.mxu0 0.0
        %1000 = vmatprep.subr.mxu0 0.0
        %1001 = vmatpush1.msra.mxu0 0.0
        %1002 = vmatprep.mubr.f32.mxu0 0.0
        %1003 = vmatmul.mubr.f32.gmra.mrb[0].mxu0 %v927
        %v1004 = vpop.f32.mrb[0].mxu0
        %v1005 = vadd.f32 %v909, %v1004
        %v1006 = vpop.f32.mrb[0].mxu0
        %1007 = vmatprep.mubr.f32.mxu0 0.0
        %1008 = vmatmul.mubr.f32.gmra.mrb[0].mxu0 %v930
        %v1009 = vpop.f32.mrb[0].mxu0
        %v1010 = vadd.f32 %v914, %v1009
        %v1011 = vpop.f32.mrb[0].mxu0
        %1012 = vmatprep.mubr.f32.mxu0 0.0
        %1013 = vmatmul.mubr.f32.gmra.mrb[0].mxu0 %v933
        %v1014 = vpop.f32.mrb[0].mxu0
        %v1015 = vadd.f32 %v919, %v1014
        %v1016 = vpop.f32.mrb[0].mxu0
        %1017 = vmatprep.mubr.f32.mxu0 0.0
        %1018 = vmatmul.mubr.f32.gmra.mrb[0].mxu0 %v936
        %v1019 = vpop.f32.mrb[0].mxu0
        %v1020 = vadd.f32 %v924, %v1019
        %v1021 = vpop.f32.mrb[0].mxu0
        %1022 = vdwg.mxu0
        %1023 = vst.msk [vmem:[%s384] sm:$0xff] %vm719, %v1005
        %1024 = vst.msk [vmem:[%s384 + $0x8] sm:$0xff] %vm719, %v1010
        %1025 = vst.msk [vmem:[%s384 + $0x10] sm:$0xff] %vm719, %v1015
        %1026 = vst.msk [vmem:[%s384 + $0x18] sm:$0xff] %vm719, %v1020
        %vm1027 = vcmask 516096
        %1028 = vst.msk [vmem:[%s390] sm:$0x1] %vm1027, %v796
        %v1029 = vsel %vm1027, %v897, 0.0
        %1030 = vadd.xlane.f32.xlu0 %v1029
        %v1031 = vpop.xlane.xlu0 %1030
        %vm1032 = vcmask 0
        %1033 = vst.msk [vmem:[%s423] sm:$0x1] %vm1032, %v1031
        %v1034 = vsel %vm719, %v813, 0.0
        %1035 = vadd.xlane.f32.xlu0 %v1034
        %v1036 = vpop.xlane.xlu0 %1035
        %v1037 = vsel %vm719, %v814, 0.0
        %1038 = vadd.xlane.f32.xlu0 %v1037
        %v1039 = vpop.xlane.xlu0 %1038
        %v1040 = vsel %vm719, %v815, 0.0
        %1041 = vadd.xlane.f32.xlu0 %v1040
        %v1042 = vpop.xlane.xlu0 %1041
        %v1043 = vsel %vm719, %v816, 0.0
        %1044 = vadd.xlane.f32.xlu0 %v1043
        %v1045 = vpop.xlane.xlu0 %1044
        %v1046 = vsel %vm719, %v817, 0.0
        %1047 = vadd.xlane.f32.xlu0 %v1046
        %v1048 = vpop.xlane.xlu0 %1047
        %v1049 = vsel %vm719, %v818, 0.0
        %1050 = vadd.xlane.f32.xlu0 %v1049
        %v1051 = vpop.xlane.xlu0 %1050
        %v1052 = vsel %vm719, %v819, 0.0
        %1053 = vadd.xlane.f32.xlu0 %v1052
        %v1054 = vpop.xlane.xlu0 %1053
        %v1055 = vsel %vm719, %v820, 0.0
        %1056 = vadd.xlane.f32.xlu0 %v1055
        %v1057 = vpop.xlane.xlu0 %1056
        %vm1058 = vcmask 7168
        %1059 = vst.msk [vmem:[%s432] sm:$0xff] %vm1058, %v1036
        %1060 = vst.msk [vmem:[%s432 + $0x8] sm:$0xff] %vm1058, %v1039
        %1061 = vst.msk [vmem:[%s432 + $0x10] sm:$0xff] %vm1058, %v1042
        %1062 = vst.msk [vmem:[%s432 + $0x18] sm:$0xff] %vm1058, %v1045
        %1063 = vst.msk [vmem:[%s432 + $0x20] sm:$0xff] %vm1058, %v1048
        %1064 = vst.msk [vmem:[%s432 + $0x28] sm:$0xff] %vm1058, %v1051
        %1065 = vst.msk [vmem:[%s432 + $0x30] sm:$0xff] %vm1058, %v1054
        %1066 = vst.msk [vmem:[%s432 + $0x38] sm:$0xff] %vm1058, %v1057
        %s1067 = sand.u32 %s204, 1
        %s1068 = scalar_lea.sflag [#allocation3], %s1067
        %s1069 = sand.u32 %s204, 1
        %s1070 = smul.addr %s1069, 32
        %s1071 = scalar_lea.vmem [#allocation2], %s1070
        %s1072 = sand.u32 %s232, 1
        %s1073 = scalar_lea.sflag [#allocation5], %s1072
        %s1074 = sand.u32 %s232, 1
        %s1075 = scalar_lea.vmem [#allocation4], %s1074
        %p1076 = scmp.lt.s32.totalorder %s32, 1
        %s1077 = scalar_select %p1076, %s32, 1
        %p1078 = scmp.lt.s32.totalorder %s33, 0
        %s1079 = scalar_select %p1078, %s33, 0
        %s1080 = sadd.s32 %s1079, %s1077
        %s1081 = scalar_lea.vmem %s9, %s1080
        %p1082 = scmp.lt.s32.totalorder %s32, 1
        %s1083 = scalar_select %p1082, %s32, 1
        %p1084 = scmp.lt.s32.totalorder %s33, 0
        %s1085 = scalar_select %p1084, %s33, 0
        %s1086 = smul.addr %s1085, 8
        %s1087 = smul.addr %s1083, 8
        %s1088 = sadd.s32 %s1086, %s1087
        %s1089 = smul.addr %s1088, 8
        %s1090 = scalar_lea.vmem %s10, %s1089
        // Predicated region
        $region49: #{tpu_custom_call.1} parent=47 // pred_check
          %p1091 = pneg %p214
        $region50: #{tpu_custom_call.1} parent=47 // pred_check_branch
          %1093 = sbr.rel (%p1091) target = $region52
        $region51: #{tpu_custom_call.1} parent=47 // pred_region
          %s1095 = ssub.s32 512, 512
          %1096 = vsyncadd %s1068, %s1095
          %s1097 = smul.addr %s32, 4
          %s1098 = sadd.s32 %s33, %s1097
          %s1099 = smul.addr %s1098, 128
          %s1100 = scalar_lea.hbm %s7, %s1099
          %s1101 = sshll.u32 %s1071, 4
          %s1102 = int_to_ptr.vmem [resolvable:$true] %s1101
          %1107 = dma.vmem_to_hbm [thread:$0]  %s1102, 512, %s1100, %s1068, 128, 128, 8
        $region52: #{tpu_custom_call.1} parent=47 // pred_fallthru
          _
        // Predicated region
        $region53: #{tpu_custom_call.1} parent=47 // pred_check
          %p1108 = pneg %p242
        $region54: #{tpu_custom_call.1} parent=47 // pred_check_branch
          %1110 = sbr.rel (%p1108) target = $region56
        $region55: #{tpu_custom_call.1} parent=47 // pred_region
          %s1112 = ssub.s32 16, 16
          %1113 = vsyncadd %s1073, %s1112
          %s1114 = sadd.s32 %s33, %s32
          %s1115 = smul.addr %s1114, 16
          %s1116 = scalar_lea.hbm %s8, %s1115
          %s1118 = sshll.u32 %s1075, 4
          %s1119 = int_to_ptr.vmem [resolvable:$true] %s1118
          %1121 = dma.vmem_to_hbm [thread:$0]  %s1119, 16, %s1116, %s1073
        $region56: #{tpu_custom_call.1} parent=47 // pred_fallthru
          _
        // Predicated region
        $region57: #{tpu_custom_call.1} parent=47 // pred_check
          %p1122 = pneg %p270
        $region58: #{tpu_custom_call.1} parent=47 // pred_check_branch
          %1124 = sbr.rel (%p1122) target = $region60
        $region59: #{tpu_custom_call.1} parent=47 // pred_region
          _
        $region60: #{tpu_custom_call.1} parent=47 // pred_fallthru
          _
        // Predicated region
        $region61: #{tpu_custom_call.1} parent=47 // pred_check
          %p1125 = pneg %p298
        $region62: #{tpu_custom_call.1} parent=47 // pred_check_branch
          %1127 = sbr.rel (%p1125) target = $region64
        $region63: #{tpu_custom_call.1} parent=47 // pred_region
          _
        $region64: #{tpu_custom_call.1} parent=47 // pred_fallthru
          _
      $region48: #{tpu_custom_call.1} parent=5 // pred_fallthru
        _
      %p1128 = scmp.le.s32.totalorder 2, %s23
      // Predicated region
      $region65: #{tpu_custom_call.1} parent=5 // pred_check
        %p1129 = pneg %p1128
      $region66: #{tpu_custom_call.1} parent=5 // pred_check_branch
        %1131 = sbr.rel (%p1129) target = $region68
      $region67: #{tpu_custom_call.1} parent=5 // pred_region
        %s1132 = ssub.s32 %s23, 2
        // Predicated region
        $region69: #{tpu_custom_call.1} parent=67 // pred_check
          %p1133 = pneg %p220
        $region70: #{tpu_custom_call.1} parent=67 // pred_check_branch
          %1135 = sbr.rel (%p1133) target = $region72
        $region71: #{tpu_custom_call.1} parent=67 // pred_region
          %s1136 = sand.u32 %s205, 1
          %s1137 = scalar_lea.sflag [#allocation3], %s1136
          %s1138 = sand.u32 %s205, 1
          %s1139 = smul.addr %s1138, 32
          %s1140 = scalar_lea.vmem [#allocation2], %s1139
          %1141 = dma.done %s1137, 512
        $region72: #{tpu_custom_call.1} parent=67 // pred_fallthru
          _
        // Predicated region
        $region73: #{tpu_custom_call.1} parent=67 // pred_check
          %p1142 = pneg %p248
        $region74: #{tpu_custom_call.1} parent=67 // pred_check_branch
          %1144 = sbr.rel (%p1142) target = $region76
        $region75: #{tpu_custom_call.1} parent=67 // pred_region
          %s1145 = sand.u32 %s233, 1
          %s1146 = scalar_lea.sflag [#allocation5], %s1145
          %s1147 = sand.u32 %s233, 1
          %s1148 = scalar_lea.vmem [#allocation4], %s1147
          %1149 = dma.done %s1146, 16
        $region76: #{tpu_custom_call.1} parent=67 // pred_fallthru
          _
        // Predicated region
        $region77: #{tpu_custom_call.1} parent=67 // pred_check
          %p1150 = pneg %p276
        $region78: #{tpu_custom_call.1} parent=67 // pred_check_branch
          %1152 = sbr.rel (%p1150) target = $region80
        $region79: #{tpu_custom_call.1} parent=67 // pred_region
          %p1153 = scmp.lt.s32.totalorder %s34, 1
          %s1154 = scalar_select %p1153, %s34, 1
          %p1155 = scmp.lt.s32.totalorder %s35, 0
          %s1156 = scalar_select %p1155, %s35, 0
          %s1157 = sadd.s32 %s1156, %s1154
          %s1158 = scalar_lea.vmem %s9, %s1157
        $region80: #{tpu_custom_call.1} parent=67 // pred_fallthru
          _
        // Predicated region
        $region81: #{tpu_custom_call.1} parent=67 // pred_check
          %p1159 = pneg %p304
        $region82: #{tpu_custom_call.1} parent=67 // pred_check_branch
          %1161 = sbr.rel (%p1159) target = $region84
        $region83: #{tpu_custom_call.1} parent=67 // pred_region
          %p1162 = scmp.lt.s32.totalorder %s34, 1
          %s1163 = scalar_select %p1162, %s34, 1
          %p1164 = scmp.lt.s32.totalorder %s35, 0
          %s1165 = scalar_select %p1164, %s35, 0
          %s1166 = smul.addr %s1165, 8
          %s1167 = smul.addr %s1163, 8
          %s1168 = sadd.s32 %s1166, %s1167
          %s1169 = smul.addr %s1168, 8
          %s1170 = scalar_lea.vmem %s10, %s1169
        $region84: #{tpu_custom_call.1} parent=67 // pred_fallthru
          _
      $region68: #{tpu_custom_call.1} parent=5 // pred_fallthru
        _
    $region6: #{tpu_custom_call.1} parent=1 // loop_footer
      %s27 = sadd.s32 1, %s23
    $region7: #{tpu_custom_call.1} parent=1 // loop_footer_branch
      %22 = sbr.rel target = $region3
    $region8: #{tpu_custom_call.1} parent=1 // loop_exit
      _
    %1171 = vsyncpa [#allocation3], 1
    %s1172 = scalar_lea.sflag [#allocation3], 1
    %1173 = vsyncpa %s1172, 1
    %1174 = vsyncpa [#allocation5], 1
    %s1175 = scalar_lea.sflag [#allocation5], 1
    %1176 = vsyncpa %s1175, 1

</llo_original>
